<compile_context>
chip_gen: v5e
topology: v5e:2x2
jax: 0.10.0
libtpu: 0.0.40
codegen_flags: <defaults>
</compile_context>

<pallas_src>
import jax
import jax.numpy as jnp
from jax.experimental import pallas as pl
from jax.experimental.pallas import tpu as pltpu


def _decoder_kernel(x_ref, w1_ref, b1_ref, w2_ref, b2_ref, o_ref, h_ref):
    # Compute the ReLU intermediate once per row tile (first N step) into VMEM
    # scratch; reuse it for every N tile of the second matmul.
    @pl.when(pl.program_id(1) == 0)
    def _():
        h = jnp.dot(x_ref[...], w1_ref[...], preferred_element_type=jnp.float32)
        h = jnp.maximum(h + b1_ref[...].astype(jnp.float32), 0.0)
        h_ref[...] = h.astype(h_ref.dtype)

    y = jnp.dot(h_ref[...], w2_ref[...], preferred_element_type=jnp.float32)
    o_ref[...] = (y + b2_ref[...].astype(jnp.float32)).astype(o_ref.dtype)


def _round_up(v, m):
    return ((v + m - 1) // m) * m


def _pad2(a, rows, cols):
    pr, pc = rows - a.shape[0], cols - a.shape[1]
    if pr == 0 and pc == 0:
        return a
    return jnp.pad(a, ((0, pr), (0, pc)))


def _vmem_usable_bytes():
    """~85% of physical per-core VMEM (v5e/v6e: 128 MiB, v7x: 64 MiB)."""
    try:
        cap = int(pltpu.get_tpu_info().vmem_capacity_bytes)
    except Exception:
        # Narrow capability-query fallback only (not a kernel-error catch):
        # assume the smallest generation (v7x per-TC VMEM).
        cap = 64 << 20
    return int(cap * 0.85)


def _choose_tiles(B, Hp, Np, itemsize, vmem_usable):
    """Footprint-aware tile selection. Returns (block_m, tn, vmem_limit_bytes)."""
    # N tile: largest lane-dense tile dividing padded N (W2/b2 stream over it).
    tn = Np
    for cand in (1024, 512, 256, 128):
        if cand <= Np and Np % cand == 0:
            tn = cand
            break
    # Footprint model (bytes): weights/biases get 2 pipeline buffers (W1/b1 are
    # fetched once since their block index is constant; W2/b2 stream), X/out
    # tiles are double-buffered, h scratch is single-buffered, plus headroom
    # for the f32 intermediates.
    fixed = 2 * (Hp * Hp + Hp + Hp * tn + tn) * itemsize
    per_row = 2 * (Hp + tn) * itemsize + Hp * itemsize + (Hp + tn) * 4
    rows_budget = max(8, (vmem_usable - fixed) // per_row)
    # Aim for >= 4 row steps (2 per core on dual-TensorCore chips) so the
    # X-tile fetch / output writeback overlap the matmuls.
    rows_for_steps = max(8, pl.cdiv(B, 4))
    block_m = 8
    for cand in (1024, 512, 256, 128, 64, 32, 16, 8):
        if cand <= rows_budget and cand <= rows_for_steps:
            block_m = cand
            break
    footprint = fixed + per_row * block_m
    vmem_limit = int(min(vmem_usable, max(32 << 20, int(footprint * 1.25) + (2 << 20))))
    return block_m, tn, vmem_limit


def nonlinear_decoder(x, w1, b1, w2, b2):
    """x: (B, H); w1: (H, H); b1: (H,); w2: (H, N); b2: (N,)  ->  (B, N).

    Weights are in (in_features, out_features) layout. Any B/H/N is accepted;
    non-lane-dense sizes are zero-padded (exact) and the result is sliced back.
    """
    B, H = x.shape
    N = w2.shape[1]
    assert w1.shape == (H, H) and b1.shape == (H,)
    assert w2.shape == (H, N) and b2.shape == (N,)

    dtype = x.dtype
    itemsize = jnp.dtype(dtype).itemsize
    Hp = _round_up(H, 128)
    Np = _round_up(N, 128)

    block_m, tn, vmem_limit = _choose_tiles(B, Hp, Np, itemsize, _vmem_usable_bytes())
    Bp = _round_up(max(B, block_m), block_m)

    # Zero-padding is exact: padded x columns / W rows are zero, padded b
    # entries are zero, so padded contributions vanish and extra output
    # columns/rows are sliced off below.
    xp = _pad2(x, Bp, Hp)
    w1p = _pad2(w1, Hp, Hp)
    b1p = _pad2(b1.reshape(1, H), 1, Hp)
    w2p = _pad2(w2, Hp, Np)
    b2p = _pad2(b2.reshape(1, N), 1, Np)

    grid = (Bp // block_m, Np // tn)

    cost = pl.CostEstimate(
        flops=2 * B * H * (H + N),
        transcendentals=0,
        bytes_accessed=itemsize * (B * H + H * H + H + H * N + N + B * N),
    )

    out = pl.pallas_call(
        _decoder_kernel,
        out_shape=jax.ShapeDtypeStruct((Bp, Np), dtype),
        grid_spec=pltpu.PrefetchScalarGridSpec(
            num_scalar_prefetch=0,
            grid=grid,
            in_specs=[
                pl.BlockSpec((block_m, Hp), lambda i, n: (i, 0)),  # X row tile (fetched once per i)
                pl.BlockSpec((Hp, Hp), lambda i, n: (0, 0)),       # W1 (constant index -> resident)
                pl.BlockSpec((1, Hp), lambda i, n: (0, 0)),        # b1
                pl.BlockSpec((Hp, tn), lambda i, n: (0, n)),       # W2 N-tile (streams along n)
                pl.BlockSpec((1, tn), lambda i, n: (0, n)),        # b2 N-tile
            ],
            out_specs=pl.BlockSpec((block_m, tn), lambda i, n: (i, n)),
            scratch_shapes=[pltpu.VMEM((block_m, Hp), dtype)],     # h = relu(x@W1+b1)
        ),
        compiler_params=pltpu.CompilerParams(
            dimension_semantics=("parallel", "arbitrary"),
            vmem_limit_bytes=vmem_limit,
        ),
        cost_estimate=cost,
    )(xp, w1p, b1p, w2p, b2p)

    if Bp != B or Np != N:
        out = out[:B, :N]
    return out


def reference(x, w1, b1, w2, b2):
    h = jnp.maximum(x @ w1 + b1, 0.0)
    return h @ w2 + b2


def _torch_like_params(key, H, N, dtype):
    """nn.Linear init U(-1/sqrt(in), 1/sqrt(in)); returns (in, out)-layout weights."""
    kw1, kb1, kw2, kb2 = jax.random.split(key, 4)
    lim = 1.0 / jnp.sqrt(jnp.float32(H))
    w1 = jax.random.uniform(kw1, (H, H), minval=-lim, maxval=lim, dtype=jnp.float32).T
    b1 = jax.random.uniform(kb1, (H,), minval=-lim, maxval=lim, dtype=jnp.float32)
    w2 = jax.random.uniform(kw2, (N, H), minval=-lim, maxval=lim, dtype=jnp.float32).T
    b2 = jax.random.uniform(kb2, (N,), minval=-lim, maxval=lim, dtype=jnp.float32)
    return tuple(a.astype(dtype) for a in (w1, b1, w2, b2))


if __name__ == "__main__":
    key = jax.random.PRNGKey(0)
    k1, k2, k3, k4 = jax.random.split(key, 4)

    # ---- f32, lane-dense shapes; exercises the N-tile axis (3 tiles of 128) --
    B, H, N = 256, 128, 384
    x = jax.random.normal(k1, (B, H), dtype=jnp.float32)
    w1, b1, w2, b2 = _torch_like_params(k2, H, N, jnp.float32)
    out = jax.block_until_ready(nonlinear_decoder(x, w1, b1, w2, b2))
    ref = reference(x, w1, b1, w2, b2)
    assert out.shape == (B, N)
    assert jnp.allclose(out, ref, atol=1e-4, rtol=1e-4), "f32 mismatch vs reference"

    # ---- bf16 path (native-dtype MXU operands, f32 accumulation) -------------
    xb, w1b, b1b, w2b, b2b = (a.astype(jnp.bfloat16) for a in (x, w1, b1, w2, b2))
    out_bf16 = jax.block_until_ready(nonlinear_decoder(xb, w1b, b1b, w2b, b2b))
    ref_bf16 = reference(*(a.astype(jnp.float32) for a in (xb, w1b, b1b, w2b, b2b)))
    assert out_bf16.shape == (B, N)
    assert jnp.allclose(out_bf16.astype(jnp.float32), ref_bf16,
                        atol=7.5e-2, rtol=7.5e-2), "bf16 mismatch vs reference"

    # ---- non-lane-dense shapes; exercises the zero-pad + slice path ----------
    B2, H2, N2 = 50, 96, 200
    x2 = jax.random.normal(k3, (B2, H2), dtype=jnp.float32)
    w1_2, b1_2, w2_2, b2_2 = _torch_like_params(k4, H2, N2, jnp.float32)
    out2 = jax.block_until_ready(nonlinear_decoder(x2, w1_2, b1_2, w2_2, b2_2))
    ref2 = reference(x2, w1_2, b1_2, w2_2, b2_2)
    assert out2.shape == (B2, N2)
    assert jnp.allclose(out2, ref2, atol=1e-4, rtol=1e-4), "padded-shape mismatch vs reference"

    print("KERNEL_OK")
</pallas_src>

<mosaic_0001>
module attributes {stable_mosaic.version = 11 : i64} {
  func.func @_decoder_kernel(%arg0: i32, %arg1: i32, %arg2: memref<64x128xf32, #tpu.memory_space<vmem>>, %arg3: memref<128x128xf32, #tpu.memory_space<vmem>>, %arg4: memref<1x128xf32, #tpu.memory_space<vmem>>, %arg5: memref<128x128xf32, #tpu.memory_space<vmem>>, %arg6: memref<1x128xf32, #tpu.memory_space<vmem>>, %arg7: memref<64x128xf32, #tpu.memory_space<vmem>>, %arg8: memref<64x128xf32, #tpu.memory_space<vmem>>) attributes {dimension_semantics = [#tpu.dimension_semantics<parallel>, #tpu.dimension_semantics<arbitrary>], iteration_bounds = array<i64: 4, 3>, scalar_prefetch = 0 : i64, scratch_operands = 1 : i64, tpu.core_type = #tpu.core_type<tc>, window_params = [{transform_indices = @transform_0, window_bounds = array<i64: 64, 128>}, {pipeline_mode = #tpu.pipeline_mode<synchronous>, transform_indices = @transform_1, window_bounds = array<i64: 128, 128>}, {pipeline_mode = #tpu.pipeline_mode<synchronous>, transform_indices = @transform_2, window_bounds = array<i64: 1, 128>}, {transform_indices = @transform_3, window_bounds = array<i64: 128, 128>}, {transform_indices = @transform_4, window_bounds = array<i64: 1, 128>}, {transform_indices = @transform_5, window_bounds = array<i64: 64, 128>}]} {
    %c0_i32 = arith.constant 0 : i32
    %0 = arith.cmpi eq, %arg1, %c0_i32 : i32
    %1 = arith.extui %0 : i1 to i32
    %c0_i32_0 = arith.constant 0 : i32
    %2 = arith.cmpi ne, %1, %c0_i32_0 : i32
    scf.if %2 {
      %c0_8 = arith.constant 0 : index
      %c0_9 = arith.constant 0 : index
      %10 = vector.load %arg2[%c0_8, %c0_9] : memref<64x128xf32, #tpu.memory_space<vmem>>, vector<64x128xf32>
      %c0_10 = arith.constant 0 : index
      %c0_11 = arith.constant 0 : index
      %11 = vector.load %arg3[%c0_10, %c0_11] : memref<128x128xf32, #tpu.memory_space<vmem>>, vector<128x128xf32>
      %cst_12 = arith.constant dense<0.000000e+00> : vector<64x128xf32>
      %12 = tpu.matmul %10, %11, %cst_12 {dimension_numbers = #tpu.dot_dimension_numbers<[1], [0], [0], [1], [0, 0, 1, 1], [], []>} : vector<64x128xf32>, vector<128x128xf32>, vector<64x128xf32> -> vector<64x128xf32>
      %c0_13 = arith.constant 0 : index
      %c0_14 = arith.constant 0 : index
      %13 = vector.load %arg4[%c0_13, %c0_14] : memref<1x128xf32, #tpu.memory_space<vmem>>, vector<1x128xf32>
      %14 = vector.broadcast %13 : vector<1x128xf32> to vector<64x128xf32>
      %15 = arith.addf %12, %14 : vector<64x128xf32>
      %cst_15 = arith.constant 0.000000e+00 : f32
      %16 = vector.broadcast %cst_15 : f32 to vector<64x128xf32>
      %17 = arith.maximumf %15, %16 : vector<64x128xf32>
      %c0_16 = arith.constant 0 : index
      %c0_17 = arith.constant 0 : index
      %18 = vector.load %arg8[%c0_16, %c0_17] : memref<64x128xf32, #tpu.memory_space<vmem>>, vector<64x128xf32>
      tpu.vector_store %arg8[%c0_16, %c0_17], %17 {strides = array<i32>} : memref<64x128xf32, #tpu.memory_space<vmem>>, vector<64x128xf32>,
    } else {
    }
    %c0 = arith.constant 0 : index
    %c0_1 = arith.constant 0 : index
    %3 = vector.load %arg8[%c0, %c0_1] : memref<64x128xf32, #tpu.memory_space<vmem>>, vector<64x128xf32>
    %c0_2 = arith.constant 0 : index
    %c0_3 = arith.constant 0 : index
    %4 = vector.load %arg5[%c0_2, %c0_3] : memref<128x128xf32, #tpu.memory_space<vmem>>, vector<128x128xf32>
    %cst = arith.constant dense<0.000000e+00> : vector<64x128xf32>
    %5 = tpu.matmul %3, %4, %cst {dimension_numbers = #tpu.dot_dimension_numbers<[1], [0], [0], [1], [0, 0, 1, 1], [], []>} : vector<64x128xf32>, vector<128x128xf32>, vector<64x128xf32> -> vector<64x128xf32>
    %c0_4 = arith.constant 0 : index
    %c0_5 = arith.constant 0 : index
    %6 = vector.load %arg6[%c0_4, %c0_5] : memref<1x128xf32, #tpu.memory_space<vmem>>, vector<1x128xf32>
    %7 = vector.broadcast %6 : vector<1x128xf32> to vector<64x128xf32>
    %8 = arith.addf %5, %7 : vector<64x128xf32>
    %c0_6 = arith.constant 0 : index
    %c0_7 = arith.constant 0 : index
    %9 = vector.load %arg7[%c0_6, %c0_7] : memref<64x128xf32, #tpu.memory_space<vmem>>, vector<64x128xf32>
    tpu.vector_store %arg7[%c0_6, %c0_7], %8 {strides = array<i32>} : memref<64x128xf32, #tpu.memory_space<vmem>>, vector<64x128xf32>,
    return
  }
  func.func @transform_0(%arg0: i32, %arg1: i32) -> (i32, i32) {
    %c0_i32 = arith.constant 0 : i32
    %c0_i32_0 = arith.constant 0 : i32
    return %arg0, %c0_i32 : i32, i32
  }
  func.func @transform_1(%arg0: i32, %arg1: i32) -> (i32, i32) {
    %c0_i32 = arith.constant 0 : i32
    %c0_i32_0 = arith.constant 0 : i32
    %c0_i32_1 = arith.constant 0 : i32
    return %c0_i32, %c0_i32_0 : i32, i32
  }
  func.func @transform_2(%arg0: i32, %arg1: i32) -> (i32, i32) {
    %c0_i32 = arith.constant 0 : i32
    %c0_i32_0 = arith.constant 0 : i32
    %c0_i32_1 = arith.constant 0 : i32
    return %c0_i32, %c0_i32_0 : i32, i32
  }
  func.func @transform_3(%arg0: i32, %arg1: i32) -> (i32, i32) {
    %c0_i32 = arith.constant 0 : i32
    %c0_i32_0 = arith.constant 0 : i32
    return %c0_i32, %arg1 : i32, i32
  }
  func.func @transform_4(%arg0: i32, %arg1: i32) -> (i32, i32) {
    %c0_i32 = arith.constant 0 : i32
    %c0_i32_0 = arith.constant 0 : i32
    return %c0_i32, %arg1 : i32, i32
  }
  func.func @transform_5(%arg0: i32, %arg1: i32) -> (i32, i32) {
    %c0_i32 = arith.constant 0 : i32
    return %arg0, %arg1 : i32, i32
  }
}

</mosaic_0001>

<llo_original>
// kernel: tpu_custom_call.1
$region0: #{tpu_custom_call.1}
  #allocation0 [shape = 'u32[]', space=smem, size = 0x4, offset = 0x4, fixed_abs, tag = 'smem constant byte address 0x4 - core index']
  #allocation1 [shape = 'u32[72,128]{1,0:T(1,128)}', space=vmem, size = 0x9000, scoped, tag = 'internal scratch']
  #allocation2 [shape = 'f32[64,128]{1,0:T(8,128)}', space=vmem, size = 0x8000, scoped, tag = 'scratch operand']
  %s0 = inlined_call_operand.hbm [shape: f32[256,128], index: 0, kind: input, shape index: {}]
  %s1 = inlined_call_operand.hbm [shape: f32[128,128], index: 1, kind: input, shape index: {}]
  %s2 = inlined_call_operand.hbm [shape: f32[1,128], index: 2, kind: input, shape index: {}]
  %s3 = inlined_call_operand.hbm [shape: f32[128,384], index: 3, kind: input, shape index: {}]
  %s4 = inlined_call_operand.vmem [shape: f32[1,384], index: 4, kind: input, shape index: {}]
  %s5 = inlined_call_operand.hbm [shape: f32[256,384], index: 5, kind: output, shape index: {}]
  %s6 = sld [smem:[#allocation0]]
  $region73: #{tpu_custom_call.1} parent=0
    _
  %s8 = ssub.s32 1, %s6
  %s9 = scalar_select 0, %s8, %s6
  $region1: #{tpu_custom_call.1} parent=0
    #allocation3 [shape = 'u8[65536]{0}', space=vmem, size = 0x10000, scoped, tag = 'input window, operand 0']
    #allocation4 [shape = 's32[2]{0}', space=sflag, size = 0x8, scoped, tag = 'scoped memory for tpu_custom_call.1']
    #allocation5 [shape = 's32[2]{0}', space=sflag, size = 0x8, scoped, tag = 'scoped memory for tpu_custom_call.1']
    #allocation6 [shape = 'u8[65536]{0}', space=vmem, size = 0x10000, scoped, tag = 'input window, operand 1, single buffered']
    #allocation7 [shape = 's32[1]{0}', space=sflag, size = 0x4, scoped, tag = 'scoped memory for tpu_custom_call.1']
    #allocation8 [shape = 'u8[512]{0}', space=vmem, size = 0x400, scoped, tag = 'input window, operand 2, single buffered']
    #allocation9 [shape = 'u8[131072]{0}', space=vmem, size = 0x20000, scoped, tag = 'input window, operand 3']
    #allocation10 [shape = 's32[2]{0}', space=sflag, size = 0x8, scoped, tag = 'scoped memory for tpu_custom_call.1']
    #allocation11 [shape = 'u8[65536]{0}', space=vmem, size = 0x10000, scoped, tag = 'output window, operand 0']
    %10 = vsyncpa [#allocation4], 0
    %s11 = scalar_lea.sflag [#allocation4], 1
    %12 = vsyncpa %s11, 0
    %13 = vsyncpa [#allocation7], 0
    %14 = vsyncpa [#allocation10], 0
    %s15 = scalar_lea.sflag [#allocation10], 1
    %16 = vsyncpa %s15, 0
    %17 = vsyncpa [#allocation5], 0
    %s18 = scalar_lea.sflag [#allocation5], 1
    %19 = vsyncpa %s18, 0
    loop: start=0, step=1, limit=14
    $region2: #{tpu_custom_call.1} parent=1 // loop_pre_header
      _
    $region3: #{tpu_custom_call.1} parent=1 // loop_header
      %s21 = sphi 0, %s25
      %p22 = scmp.ge.s32.totalorder %s21, 14
      %s28 = sphi 0, %s40
      %s29 = sphi 0, %s36
      %s30 = sphi 0, %s28
      %s31 = sphi 0, %s29
      %s32 = sphi 0, %s30
      %s33 = sphi 0, %s31
      %s43 = sphi 0, %s45
      %s46 = sphi 0, %s43
      %s47 = sphi 0, %s46
      %s63 = sphi 0, %s47
      %s67 = sphi 0, %s67
      %s69 = sphi 0, %s67
      %s70 = sphi 0, %s69
      %s84 = sphi 0, %s70
      %s88 = sphi 0, %s88
      %s90 = sphi 0, %s88
      %s91 = sphi 0, %s90
      %s105 = sphi 0, %s91
      %s111 = sphi 0, %s113
      %s114 = sphi 0, %s111
      %s115 = sphi 0, %s114
      %s131 = sphi 0, %s115
      %s137 = sphi 0, %s139
      %s140 = sphi 0, %s137
      %s141 = sphi 0, %s140
      %s157 = sphi 0, %s141
      %s165 = sphi 0, %s167
      %s168 = sphi 0, %s165
      %s169 = sphi 0, %s168
      %s185 = sphi 0, %s169
    $region4: #{tpu_custom_call.1} parent=1 // loop_header_branch
      %24 = sbr.rel (%p22) target = $region8
    $region5: #{tpu_custom_call.1} parent=1 // loop_body
      %s26 = ssub.s32 %s21, 1
      %s27 = ssub.s32 %s21, 2
      %s34 = sadd.s32 1, %s29
      %p35 = scmp.ge.s32.totalorder %s34, 3
      %s36 = scalar_select %p35, 0, %s34
      %s37 = sadd.s32 1, %s28
      %s38 = scalar_select %p35, %s37, %s28
      %p39 = scmp.ge.s32.totalorder %s38, 4
      %s40 = scalar_select %p39, 0, %s38
      %s41 = ssub.s32 %s28, %s40
      %p42 = scmp.eq.s32.totalorder %s41, 0
      %s44 = sadd.s32 %s43, 1
      %s45 = scalar_select %p42, %s43, %s44
      %p48 = pneg %p42
      %p49 = scmp.eq.s32.totalorder %s21, 11
      %p50 = por %p48, %p49
      %p51 = scmp.ne.s32.totalorder %s43, %s46
      %p52 = scmp.eq.s32.totalorder %s21, 0
      %p53 = por %p51, %p52
      %p54 = scmp.ne.s32.totalorder %s43, %s46
      %p55 = scmp.eq.s32.totalorder %s26, 11
      %p56 = por %p54, %p55
      %p57 = scmp.ne.s32.totalorder %s46, %s47
      %p58 = scmp.eq.s32.totalorder %s26, 0
      %p59 = por %p57, %p58
      %p60 = scmp.ne.s32.totalorder %s46, %s47
      %p61 = scmp.eq.s32.totalorder %s27, 11
      %p62 = por %p60, %p61
      %p64 = scmp.ne.s32.totalorder %s47, %s63
      %p65 = scmp.eq.s32.totalorder %s27, 0
      %p66 = por %p64, %p65
      %s68 = sadd.s32 %s67, 1
      %p71 = scmp.eq.s32.totalorder %s21, 11
      %p72 = scmp.ne.s32.totalorder %s67, %s69
      %p73 = scmp.eq.s32.totalorder %s21, 0
      %p74 = por %p72, %p73
      %p75 = scmp.ne.s32.totalorder %s67, %s69
      %p76 = scmp.eq.s32.totalorder %s26, 11
      %p77 = por %p75, %p76
      %p78 = scmp.ne.s32.totalorder %s69, %s70
      %p79 = scmp.eq.s32.totalorder %s26, 0
      %p80 = por %p78, %p79
      %p81 = scmp.ne.s32.totalorder %s69, %s70
      %p82 = scmp.eq.s32.totalorder %s27, 11
      %p83 = por %p81, %p82
      %p85 = scmp.ne.s32.totalorder %s70, %s84
      %p86 = scmp.eq.s32.totalorder %s27, 0
      %p87 = por %p85, %p86
      %s89 = sadd.s32 %s88, 1
      %p92 = scmp.eq.s32.totalorder %s21, 11
      %p93 = scmp.ne.s32.totalorder %s88, %s90
      %p94 = scmp.eq.s32.totalorder %s21, 0
      %p95 = por %p93, %p94
      %p96 = scmp.ne.s32.totalorder %s88, %s90
      %p97 = scmp.eq.s32.totalorder %s26, 11
      %p98 = por %p96, %p97
      %p99 = scmp.ne.s32.totalorder %s90, %s91
      %p100 = scmp.eq.s32.totalorder %s26, 0
      %p101 = por %p99, %p100
      %p102 = scmp.ne.s32.totalorder %s90, %s91
      %p103 = scmp.eq.s32.totalorder %s27, 11
      %p104 = por %p102, %p103
      %p106 = scmp.ne.s32.totalorder %s91, %s105
      %p107 = scmp.eq.s32.totalorder %s27, 0
      %p108 = por %p106, %p107
      %s109 = ssub.s32 %s29, %s36
      %p110 = scmp.eq.s32.totalorder %s109, 0
      %s112 = sadd.s32 %s111, 1
      %s113 = scalar_select %p110, %s111, %s112
      %p116 = pneg %p110
      %p117 = scmp.eq.s32.totalorder %s21, 11
      %p118 = por %p116, %p117
      %p119 = scmp.ne.s32.totalorder %s111, %s114
      %p120 = scmp.eq.s32.totalorder %s21, 0
      %p121 = por %p119, %p120
      %p122 = scmp.ne.s32.totalorder %s111, %s114
      %p123 = scmp.eq.s32.totalorder %s26, 11
      %p124 = por %p122, %p123
      %p125 = scmp.ne.s32.totalorder %s114, %s115
      %p126 = scmp.eq.s32.totalorder %s26, 0
      %p127 = por %p125, %p126
      %p128 = scmp.ne.s32.totalorder %s114, %s115
      %p129 = scmp.eq.s32.totalorder %s27, 11
      %p130 = por %p128, %p129
      %p132 = scmp.ne.s32.totalorder %s115, %s131
      %p133 = scmp.eq.s32.totalorder %s27, 0
      %p134 = por %p132, %p133
      %s135 = ssub.s32 %s29, %s36
      %p136 = scmp.eq.s32.totalorder %s135, 0
      %s138 = sadd.s32 %s137, 1
      %s139 = scalar_select %p136, %s137, %s138
      %p142 = pneg %p136
      %p143 = scmp.eq.s32.totalorder %s21, 11
      %p144 = por %p142, %p143
      %p145 = scmp.ne.s32.totalorder %s137, %s140
      %p146 = scmp.eq.s32.totalorder %s21, 0
      %p147 = por %p145, %p146
      %p148 = scmp.ne.s32.totalorder %s137, %s140
      %p149 = scmp.eq.s32.totalorder %s26, 11
      %p150 = por %p148, %p149
      %p151 = scmp.ne.s32.totalorder %s140, %s141
      %p152 = scmp.eq.s32.totalorder %s26, 0
      %p153 = por %p151, %p152
      %p154 = scmp.ne.s32.totalorder %s140, %s141
      %p155 = scmp.eq.s32.totalorder %s27, 11
      %p156 = por %p154, %p155
      %p158 = scmp.ne.s32.totalorder %s141, %s157
      %p159 = scmp.eq.s32.totalorder %s27, 0
      %p160 = por %p158, %p159
      %s161 = ssub.s32 %s28, %s40
      %s162 = ssub.s32 %s29, %s36
      %s163 = sor.u32 %s161, %s162
      %p164 = scmp.eq.s32.totalorder %s163, 0
      %s166 = sadd.s32 %s165, 1
      %s167 = scalar_select %p164, %s165, %s166
      %p170 = pneg %p164
      %p171 = scmp.eq.s32.totalorder %s21, 11
      %p172 = por %p170, %p171
      %p173 = scmp.ne.s32.totalorder %s165, %s168
      %p174 = scmp.eq.s32.totalorder %s21, 0
      %p175 = por %p173, %p174
      %p176 = scmp.ne.s32.totalorder %s165, %s168
      %p177 = scmp.eq.s32.totalorder %s26, 11
      %p178 = por %p176, %p177
      %p179 = scmp.ne.s32.totalorder %s168, %s169
      %p180 = scmp.eq.s32.totalorder %s26, 0
      %p181 = por %p179, %p180
      %p182 = scmp.ne.s32.totalorder %s168, %s169
      %p183 = scmp.eq.s32.totalorder %s27, 11
      %p184 = por %p182, %p183
      %p186 = scmp.ne.s32.totalorder %s169, %s185
      %p187 = scmp.eq.s32.totalorder %s27, 0
      %p188 = por %p186, %p187
      %p189 = scmp.le.s32.totalorder 1, %s21
      %p190 = scmp.lt.s32.totalorder %s21, 13
      %p191 = pnand %p189, %p190
      %p192 = pneg %p191
      // Predicated region
      $region9: #{tpu_custom_call.1} parent=5 // pred_check
        _
      $region10: #{tpu_custom_call.1} parent=5 // pred_check_branch
        %194 = sbr.rel (%p191) target = $region12
      $region11: #{tpu_custom_call.1} parent=5 // pred_region
        %s195 = ssub.s32 %s21, 1
        // Predicated region
        $region13: #{tpu_custom_call.1} parent=11 // pred_check
          %p196 = pneg %p80
        $region14: #{tpu_custom_call.1} parent=11 // pred_check_branch
          %198 = sbr.rel (%p196) target = $region16
        $region15: #{tpu_custom_call.1} parent=11 // pred_region
          %200 = vsyncadd [#allocation7], 0
          %s201 = sshll.u32 %s1, 4
          %s202 = int_to_ptr.hbm [resolvable:$true] %s201
          %s203 = sshll.u32 [#allocation6], 4
          %s204 = int_to_ptr.vmem [resolvable:$true] %s203
          %209 = dma.hbm_to_vmem [thread:$0]  %s202, 2048, %s204, [#allocation7], 128, 128, 8
        $region16: #{tpu_custom_call.1} parent=11 // pred_fallthru
          _
        // Predicated region
        $region17: #{tpu_custom_call.1} parent=11 // pred_check
          %p210 = pneg %p101
        $region18: #{tpu_custom_call.1} parent=11 // pred_check_branch
          %212 = sbr.rel (%p210) target = $region20
        $region19: #{tpu_custom_call.1} parent=11 // pred_region
          %214 = vsyncadd [#allocation7], 0
          %s216 = sshll.u32 %s2, 4
          %s217 = int_to_ptr.hbm [resolvable:$true] %s216
          %s218 = sshll.u32 [#allocation8], 4
          %s219 = int_to_ptr.vmem [resolvable:$true] %s218
          %221 = dma.hbm_to_vmem [thread:$0]  %s217, 16, %s219, [#allocation7]
        $region20: #{tpu_custom_call.1} parent=11 // pred_fallthru
          _
      $region12: #{tpu_custom_call.1} parent=5 // pred_fallthru
        _
      %p222 = scmp.lt.s32.totalorder %s21, 12
      // Predicated region
      $region21: #{tpu_custom_call.1} parent=5 // pred_check
        %p223 = pneg %p222
      $region22: #{tpu_custom_call.1} parent=5 // pred_check_branch
        %225 = sbr.rel (%p223) target = $region24
      $region23: #{tpu_custom_call.1} parent=5 // pred_region
        // Predicated region
        $region25: #{tpu_custom_call.1} parent=23 // pred_check
          %p226 = pneg %p53
        $region26: #{tpu_custom_call.1} parent=23 // pred_check_branch
          %228 = sbr.rel (%p226) target = $region28
        $region27: #{tpu_custom_call.1} parent=23 // pred_region
          %s229 = sand.u32 %s43, 1
          %s230 = scalar_lea.sflag [#allocation4], %s229
          %s231 = sand.u32 %s43, 1
          %s232 = smul.addr %s231, 64
          %s233 = scalar_lea.vmem [#allocation3], %s232
          %s234 = smul.u32 8, %s28
          %236 = vsyncadd %s230, 0
          %s237 = smul.addr %s234, 8
          %s238 = scalar_lea.hbm %s0, %s237
          %s239 = sshll.u32 %s238, 4
          %s240 = int_to_ptr.hbm [resolvable:$true] %s239
          %s241 = sshll.u32 %s233, 4
          %s242 = int_to_ptr.vmem [resolvable:$true] %s241
          %247 = dma.hbm_to_vmem [thread:$0]  %s240, 1024, %s242, %s230, 128, 128, 8
        $region28: #{tpu_custom_call.1} parent=23 // pred_fallthru
          _
        // Predicated region
        $region29: #{tpu_custom_call.1} parent=23 // pred_check
          %p248 = pneg %p121
        $region30: #{tpu_custom_call.1} parent=23 // pred_check_branch
          %250 = sbr.rel (%p248) target = $region32
        $region31: #{tpu_custom_call.1} parent=23 // pred_region
          %s251 = sand.u32 %s111, 1
          %s252 = scalar_lea.sflag [#allocation10], %s251
          %s253 = sand.u32 %s111, 1
          %s254 = smul.addr %s253, 128
          %s255 = scalar_lea.vmem [#allocation9], %s254
          %257 = vsyncadd %s252, 0
          %s258 = smul.addr %s29, 8
          %s259 = scalar_lea.hbm %s3, %s258
          %s260 = sshll.u32 %s259, 4
          %s261 = int_to_ptr.hbm [resolvable:$true] %s260
          %s262 = sshll.u32 %s255, 4
          %s263 = int_to_ptr.vmem [resolvable:$true] %s262
          %268 = dma.hbm_to_vmem [thread:$0]  %s261, 2048, %s263, %s252, 384, 128, 8
        $region32: #{tpu_custom_call.1} parent=23 // pred_fallthru
          _
        // Predicated region
        $region33: #{tpu_custom_call.1} parent=23 // pred_check
          %p269 = pneg %p147
        $region34: #{tpu_custom_call.1} parent=23 // pred_check_branch
          %271 = sbr.rel (%p269) target = $region36
        $region35: #{tpu_custom_call.1} parent=23 // pred_region
          %p272 = scmp.lt.s32.totalorder %s29, 2
          %s273 = scalar_select %p272, %s29, 2
          %s274 = scalar_lea.vmem %s4, %s273
        $region36: #{tpu_custom_call.1} parent=23 // pred_fallthru
          _
      $region24: #{tpu_custom_call.1} parent=5 // pred_fallthru
        _
      %p275 = scmp.le.s32.totalorder 1, %s21
      %p276 = scmp.lt.s32.totalorder %s21, 13
      %p277 = pnand %p275, %p276
      %p278 = pneg %p277
      // Predicated region
      $region37: #{tpu_custom_call.1} parent=5 // pred_check
        _
      $region38: #{tpu_custom_call.1} parent=5 // pred_check_branch
        %280 = sbr.rel (%p277) target = $region40
      $region39: #{tpu_custom_call.1} parent=5 // pred_region
        %s281 = ssub.s32 %s21, 1
        %s282 = sand.u32 %s46, 1
        %s283 = scalar_lea.sflag [#allocation4], %s282
        %s284 = sand.u32 %s46, 1
        %s285 = smul.addr %s284, 64
        %s286 = scalar_lea.vmem [#allocation3], %s285
        // Predicated region
        $region41: #{tpu_custom_call.1} parent=39 // pred_check
          %p287 = pneg %p59
        $region42: #{tpu_custom_call.1} parent=39 // pred_check_branch
          %289 = sbr.rel (%p287) target = $region44
        $region43: #{tpu_custom_call.1} parent=39 // pred_region
          %291 = dma.done %s283, 1024
        $region44: #{tpu_custom_call.1} parent=39 // pred_fallthru
          _
        // Predicated region
        $region45: #{tpu_custom_call.1} parent=39 // pred_check
          %p292 = pneg %p80
        $region46: #{tpu_custom_call.1} parent=39 // pred_check_branch
          %294 = sbr.rel (%p292) target = $region48
        $region47: #{tpu_custom_call.1} parent=39 // pred_region
          %296 = dma.done [#allocation7], 2048
        $region48: #{tpu_custom_call.1} parent=39 // pred_fallthru
          _
        // Predicated region
        $region49: #{tpu_custom_call.1} parent=39 // pred_check
          %p297 = pneg %p101
        $region50: #{tpu_custom_call.1} parent=39 // pred_check_branch
          %299 = sbr.rel (%p297) target = $region52
        $region51: #{tpu_custom_call.1} parent=39 // pred_region
          %301 = dma.done [#allocation7], 16
        $region52: #{tpu_custom_call.1} parent=39 // pred_fallthru
          _
        %s302 = sand.u32 %s114, 1
        %s303 = scalar_lea.sflag [#allocation10], %s302
        %s304 = sand.u32 %s114, 1
        %s305 = smul.addr %s304, 128
        %s306 = scalar_lea.vmem [#allocation9], %s305
        // Predicated region
        $region53: #{tpu_custom_call.1} parent=39 // pred_check
          %p307 = pneg %p127
        $region54: #{tpu_custom_call.1} parent=39 // pred_check_branch
          %309 = sbr.rel (%p307) target = $region56
        $region55: #{tpu_custom_call.1} parent=39 // pred_region
          %311 = dma.done %s303, 2048
        $region56: #{tpu_custom_call.1} parent=39 // pred_fallthru
          _
        %s312 = sand.u32 %s46, 1
        %s313 = scalar_lea.sflag [#allocation4], %s312
        %s314 = sand.u32 %s46, 1
        %s315 = smul.addr %s314, 64
        %s316 = scalar_lea.vmem [#allocation3], %s315
        %p317 = pneg %p59
        %p318 = pneg %p56
        %p319 = pneg %p80
        %p320 = pneg %p77
        %p321 = pneg %p101
        %p322 = pneg %p98
        %s323 = sand.u32 %s114, 1
        %s324 = scalar_lea.sflag [#allocation10], %s323
        %s325 = sand.u32 %s114, 1
        %s326 = smul.addr %s325, 128
        %s327 = scalar_lea.vmem [#allocation9], %s326
        %p328 = pneg %p127
        %p329 = pneg %p124
        %p330 = scmp.lt.s32.totalorder %s31, 2
        %s331 = scalar_select %p330, %s31, 2
        %s332 = scalar_lea.vmem %s4, %s331
        %p333 = pneg %p153
        %p334 = pneg %p150
        %p335 = pneg %p181
        %p336 = pneg %p178
        %s337 = sand.u32 %s168, 1
        %s338 = scalar_lea.sflag [#allocation5], %s337
        %s339 = sand.u32 %s168, 1
        %s340 = smul.addr %s339, 64
        %s341 = scalar_lea.vmem [#allocation11], %s340
        %s342 = smul.u32 8, %s30
        %p343 = scmp.lt.s32.totalorder %s31, 2
        %s344 = scalar_select %p343, %s31, 2
        %s345 = scalar_lea.vmem %s4, %s344
        %s346 = smul.u32 8, %s30
        %p347 = scmp.eq.s32.totalorder %s31, 0
        // Predicated region
        $region57: #{tpu_custom_call.1} parent=39 // pred_check
          %p348 = pneg %p347
        $region58: #{tpu_custom_call.1} parent=39 // pred_check_branch
          %350 = sbr.rel (%p348) target = $region60
        $region59: #{tpu_custom_call.1} parent=39 // pred_region
          %v351 = vld [vmem:[%s286] sm:$0xff]
          %v352 = vld [vmem:[%s286 + $0x8] sm:$0xff]
          %v353 = vld [vmem:[%s286 + $0x10] sm:$0xff]
          %v354 = vld [vmem:[%s286 + $0x18] sm:$0xff]
          %v355 = vld [vmem:[%s286 + $0x20] sm:$0xff]
          %v356 = vld [vmem:[%s286 + $0x28] sm:$0xff]
          %v357 = vld [vmem:[%s286 + $0x30] sm:$0xff]
          %v358 = vld [vmem:[%s286 + $0x38] sm:$0xff]
          %v359 = vld [vmem:[#allocation6] sm:$0xff]
          %v360 = vld [vmem:[#allocation6 + $0x8] sm:$0xff]
          %v361 = vld [vmem:[#allocation6 + $0x10] sm:$0xff]
          %v362 = vld [vmem:[#allocation6 + $0x18] sm:$0xff]
          %v363 = vld [vmem:[#allocation6 + $0x20] sm:$0xff]
          %v364 = vld [vmem:[#allocation6 + $0x28] sm:$0xff]
          %v365 = vld [vmem:[#allocation6 + $0x30] sm:$0xff]
          %v366 = vld [vmem:[#allocation6 + $0x38] sm:$0xff]
          %v367 = vld [vmem:[#allocation6 + $0x40] sm:$0xff]
          %v368 = vld [vmem:[#allocation6 + $0x48] sm:$0xff]
          %v369 = vld [vmem:[#allocation6 + $0x50] sm:$0xff]
          %v370 = vld [vmem:[#allocation6 + $0x58] sm:$0xff]
          %v371 = vld [vmem:[#allocation6 + $0x60] sm:$0xff]
          %v372 = vld [vmem:[#allocation6 + $0x68] sm:$0xff]
          %v373 = vld [vmem:[#allocation6 + $0x70] sm:$0xff]
          %v374 = vld [vmem:[#allocation6 + $0x78] sm:$0xff]
          %v375 = vld [vmem:[#allocation8] sm:$0x1]
          %v377 = vperm.slane %v375, 0
          %379 = vmatpush.msra.mxu0 %v374
          %380 = vmatpush.msra.mxu0 %v373
          %381 = vmatpush.msra.mxu0 %v372
          %382 = vmatpush.msra.mxu0 %v371
          %383 = vmatpush.msra.mxu0 %v370
          %384 = vmatpush.msra.mxu0 %v369
          %385 = vmatpush.msra.mxu0 %v368
          %386 = vmatpush.msra.mxu0 %v367
          %387 = vmatpush.msra.mxu0 %v366
          %388 = vmatpush.msra.mxu0 %v365
          %389 = vmatpush.msra.mxu0 %v364
          %390 = vmatpush.msra.mxu0 %v363
          %391 = vmatpush.msra.mxu0 %v362
          %392 = vmatpush.msra.mxu0 %v361
          %393 = vmatpush.msra.mxu0 %v360
          %394 = vmatpush.msra.mxu0 %v359
          %395 = vmatmul.f32.gmra.mxu0 %v351
          %v396 = vpop.f32.mrf.mxu0
          %v397 = vadd.f32 %v377, %v396
          %398 = vmatmul.f32.gmra.mxu0 %v352
          %v399 = vpop.f32.mrf.mxu0
          %v400 = vadd.f32 %v377, %v399
          %401 = vmatmul.f32.gmra.mxu0 %v353
          %v402 = vpop.f32.mrf.mxu0
          %v403 = vadd.f32 %v377, %v402
          %404 = vmatmul.f32.gmra.mxu0 %v354
          %v405 = vpop.f32.mrf.mxu0
          %v406 = vadd.f32 %v377, %v405
          %407 = vmatmul.f32.gmra.mxu0 %v355
          %v408 = vpop.f32.mrf.mxu0
          %v409 = vadd.f32 %v377, %v408
          %410 = vmatmul.f32.gmra.mxu0 %v356
          %v411 = vpop.f32.mrf.mxu0
          %v412 = vadd.f32 %v377, %v411
          %413 = vmatmul.f32.gmra.mxu0 %v357
          %v414 = vpop.f32.mrf.mxu0
          %v415 = vadd.f32 %v377, %v414
          %416 = vmatmul.f32.gmra.mxu0 %v358
          %v417 = vpop.f32.mrf.mxu0
          %v418 = vadd.f32 %v377, %v417
          %419 = vdwg.mxu0
          %v420 = vmax.f32 %v397, 0.0
          %v421 = vmax.f32 %v400, 0.0
          %v422 = vmax.f32 %v403, 0.0
          %v423 = vmax.f32 %v406, 0.0
          %v424 = vmax.f32 %v409, 0.0
          %v425 = vmax.f32 %v412, 0.0
          %v426 = vmax.f32 %v415, 0.0
          %v427 = vmax.f32 %v418, 0.0
          %428 = vst [vmem:[#allocation2] sm:$0xff] %v420
          %429 = vst [vmem:[#allocation2 + $0x8] sm:$0xff] %v421
          %430 = vst [vmem:[#allocation2 + $0x10] sm:$0xff] %v422
          %431 = vst [vmem:[#allocation2 + $0x18] sm:$0xff] %v423
          %432 = vst [vmem:[#allocation2 + $0x20] sm:$0xff] %v424
          %433 = vst [vmem:[#allocation2 + $0x28] sm:$0xff] %v425
          %434 = vst [vmem:[#allocation2 + $0x30] sm:$0xff] %v426
          %435 = vst [vmem:[#allocation2 + $0x38] sm:$0xff] %v427
        $region60: #{tpu_custom_call.1} parent=39 // pred_fallthru
          _
        %v436 = vld [vmem:[#allocation2] sm:$0xff]
        %v437 = vld [vmem:[#allocation2 + $0x8] sm:$0xff]
        %v438 = vld [vmem:[#allocation2 + $0x10] sm:$0xff]
        %v439 = vld [vmem:[#allocation2 + $0x18] sm:$0xff]
        %v440 = vld [vmem:[#allocation2 + $0x20] sm:$0xff]
        %v441 = vld [vmem:[#allocation2 + $0x28] sm:$0xff]
        %v442 = vld [vmem:[#allocation2 + $0x30] sm:$0xff]
        %v443 = vld [vmem:[#allocation2 + $0x38] sm:$0xff]
        %v444 = vld [vmem:[%s306] sm:$0xff]
        %v445 = vld [vmem:[%s306 + $0x8] sm:$0xff]
        %v446 = vld [vmem:[%s306 + $0x10] sm:$0xff]
        %v447 = vld [vmem:[%s306 + $0x18] sm:$0xff]
        %v448 = vld [vmem:[%s306 + $0x20] sm:$0xff]
        %v449 = vld [vmem:[%s306 + $0x28] sm:$0xff]
        %v450 = vld [vmem:[%s306 + $0x30] sm:$0xff]
        %v451 = vld [vmem:[%s306 + $0x38] sm:$0xff]
        %v452 = vld [vmem:[%s306 + $0x40] sm:$0xff]
        %v453 = vld [vmem:[%s306 + $0x48] sm:$0xff]
        %v454 = vld [vmem:[%s306 + $0x50] sm:$0xff]
        %v455 = vld [vmem:[%s306 + $0x58] sm:$0xff]
        %v456 = vld [vmem:[%s306 + $0x60] sm:$0xff]
        %v457 = vld [vmem:[%s306 + $0x68] sm:$0xff]
        %v458 = vld [vmem:[%s306 + $0x70] sm:$0xff]
        %v459 = vld [vmem:[%s306 + $0x78] sm:$0xff]
        %v460 = vld [vmem:[%s345] sm:$0x1]
        %v462 = vperm.slane %v460, 0
        %464 = vmatpush.msra.mxu0 %v459
        %465 = vmatpush.msra.mxu0 %v458
        %466 = vmatpush.msra.mxu0 %v457
        %467 = vmatpush.msra.mxu0 %v456
        %468 = vmatpush.msra.mxu0 %v455
        %469 = vmatpush.msra.mxu0 %v454
        %470 = vmatpush.msra.mxu0 %v453
        %471 = vmatpush.msra.mxu0 %v452
        %472 = vmatpush.msra.mxu0 %v451
        %473 = vmatpush.msra.mxu0 %v450
        %474 = vmatpush.msra.mxu0 %v449
        %475 = vmatpush.msra.mxu0 %v448
        %476 = vmatpush.msra.mxu0 %v447
        %477 = vmatpush.msra.mxu0 %v446
        %478 = vmatpush.msra.mxu0 %v445
        %479 = vmatpush.msra.mxu0 %v444
        %480 = vmatmul.f32.gmra.mxu0 %v436
        %v481 = vpop.f32.mrf.mxu0
        %v482 = vadd.f32 %v462, %v481
        %483 = vmatmul.f32.gmra.mxu0 %v437
        %v484 = vpop.f32.mrf.mxu0
        %v485 = vadd.f32 %v462, %v484
        %486 = vmatmul.f32.gmra.mxu0 %v438
        %v487 = vpop.f32.mrf.mxu0
        %v488 = vadd.f32 %v462, %v487
        %489 = vmatmul.f32.gmra.mxu0 %v439
        %v490 = vpop.f32.mrf.mxu0
        %v491 = vadd.f32 %v462, %v490
        %492 = vmatmul.f32.gmra.mxu0 %v440
        %v493 = vpop.f32.mrf.mxu0
        %v494 = vadd.f32 %v462, %v493
        %495 = vmatmul.f32.gmra.mxu0 %v441
        %v496 = vpop.f32.mrf.mxu0
        %v497 = vadd.f32 %v462, %v496
        %498 = vmatmul.f32.gmra.mxu0 %v442
        %v499 = vpop.f32.mrf.mxu0
        %v500 = vadd.f32 %v462, %v499
        %501 = vmatmul.f32.gmra.mxu0 %v443
        %v502 = vpop.f32.mrf.mxu0
        %v503 = vadd.f32 %v462, %v502
        %504 = vdwg.mxu0
        %505 = vst [vmem:[%s341] sm:$0xff] %v482
        %506 = vst [vmem:[%s341 + $0x8] sm:$0xff] %v485
        %507 = vst [vmem:[%s341 + $0x10] sm:$0xff] %v488
        %508 = vst [vmem:[%s341 + $0x18] sm:$0xff] %v491
        %509 = vst [vmem:[%s341 + $0x20] sm:$0xff] %v494
        %510 = vst [vmem:[%s341 + $0x28] sm:$0xff] %v497
        %511 = vst [vmem:[%s341 + $0x30] sm:$0xff] %v500
        %512 = vst [vmem:[%s341 + $0x38] sm:$0xff] %v503
        %s513 = sand.u32 %s168, 1
        %s514 = scalar_lea.sflag [#allocation5], %s513
        %s515 = sand.u32 %s168, 1
        %s516 = smul.addr %s515, 64
        %s517 = scalar_lea.vmem [#allocation11], %s516
        // Predicated region
        $region61: #{tpu_custom_call.1} parent=39 // pred_check
          %p518 = pneg %p178
        $region62: #{tpu_custom_call.1} parent=39 // pred_check_branch
          %520 = sbr.rel (%p518) target = $region64
        $region63: #{tpu_custom_call.1} parent=39 // pred_region
          %s521 = smul.u32 8, %s30
          %523 = vsyncadd %s514, 0
          %s524 = smul.addr %s521, 3
          %s525 = sadd.s32 %s31, %s524
          %s526 = smul.addr %s525, 8
          %s527 = scalar_lea.hbm %s5, %s526
          %s528 = sshll.u32 %s517, 4
          %s529 = int_to_ptr.vmem [resolvable:$true] %s528
          %s530 = sshll.u32 %s527, 4
          %s531 = int_to_ptr.hbm [resolvable:$true] %s530
          %536 = dma.vmem_to_hbm [thread:$0]  %s529, 1024, %s531, %s514, 128, 384, 8
        $region64: #{tpu_custom_call.1} parent=39 // pred_fallthru
          _
      $region40: #{tpu_custom_call.1} parent=5 // pred_fallthru
        _
      %p537 = scmp.le.s32.totalorder 2, %s21
      // Predicated region
      $region65: #{tpu_custom_call.1} parent=5 // pred_check
        %p538 = pneg %p537
      $region66: #{tpu_custom_call.1} parent=5 // pred_check_branch
        %540 = sbr.rel (%p538) target = $region68
      $region67: #{tpu_custom_call.1} parent=5 // pred_region
        %s541 = ssub.s32 %s21, 2
        // Predicated region
        $region69: #{tpu_custom_call.1} parent=67 // pred_check
          %p542 = pneg %p184
        $region70: #{tpu_custom_call.1} parent=67 // pred_check_branch
          %544 = sbr.rel (%p542) target = $region72
        $region71: #{tpu_custom_call.1} parent=67 // pred_region
          %s545 = sand.u32 %s169, 1
          %s546 = scalar_lea.sflag [#allocation5], %s545
          %s547 = sand.u32 %s169, 1
          %s548 = smul.addr %s547, 64
          %s549 = scalar_lea.vmem [#allocation11], %s548
          %551 = dma.done %s546, 1024
        $region72: #{tpu_custom_call.1} parent=67 // pred_fallthru
          _
      $region68: #{tpu_custom_call.1} parent=5 // pred_fallthru
        _
    $region6: #{tpu_custom_call.1} parent=1 // loop_footer
      %s25 = sadd.s32 1, %s21
    $region7: #{tpu_custom_call.1} parent=1 // loop_footer_branch
      %20 = sbr.rel target = $region3
    $region8: #{tpu_custom_call.1} parent=1 // loop_exit
      _
    %552 = vsyncpa [#allocation4], 1
    %s553 = scalar_lea.sflag [#allocation4], 1
    %554 = vsyncpa %s553, 1
    %555 = vsyncpa [#allocation7], 1
    %556 = vsyncpa [#allocation10], 1
    %s557 = scalar_lea.sflag [#allocation10], 1
    %558 = vsyncpa %s557, 1
    %559 = vsyncpa [#allocation5], 1
    %s560 = scalar_lea.sflag [#allocation5], 1
    %561 = vsyncpa %s560, 1

</llo_original>
